<compile_context>
chip_gen: v5e
topology: v5e:2x2
jax: 0.10.0
libtpu: 0.0.40
codegen_flags: <defaults>
</compile_context>

<pallas_src>
import functools

import jax
import jax.numpy as jnp
from jax.experimental import pallas as pl
from jax.experimental.pallas import tpu as pltpu


LANE = 128
SUBLANE = 8


def _round_up(x, m):
    return (x + m - 1) // m * m


def _round_down(x, m):
    return x // m * m


def trigram_kernel(idx_ref, f_ref, b1_ref, w2_ref, b2_ref, out_ref, *,
                   vocab_size, context_size):
    """Fused forward: one-hot gather over pre-fused (emb @ W1_c) tables -> +b1 -> tanh
    -> linear2 -> log_softmax.  Matmuls are lane/tile dense; accumulation is f32."""
    idx = idx_ref[...]                                   # (TB, C) int32
    tb = idx.shape[0]
    _, vp, hp = f_ref.shape

    # One-hot column iota hoisted out of the context loop.
    col_iota = jax.lax.broadcasted_iota(jnp.int32, (tb, vp), 1)

    # linear1 pre-activation: sum_c onehot_c @ (emb @ W1_c)  -> (TB, Hp)
    acc = jnp.zeros((tb, hp), jnp.float32)
    for c in range(context_size):                        # static unroll, C is tiny
        onehot = (idx[:, c:c + 1] == col_iota).astype(f_ref.dtype)   # (TB, Vp), exact
        acc = acc + jnp.dot(onehot, f_ref[c], preferred_element_type=jnp.float32)

    h = jnp.tanh(acc + b1_ref[...])                      # (TB, Hp) f32; padded cols stay 0
    logits = jnp.dot(h.astype(w2_ref.dtype), w2_ref[...],
                     preferred_element_type=jnp.float32) + b2_ref[...]   # (TB, Vp) f32

    # Mask padded vocab lanes so the softmax normalization is exact.
    col = jax.lax.broadcasted_iota(jnp.int32, logits.shape, 1)
    logits = jnp.where(col < vocab_size, logits, jnp.float32(-1e30))

    # Numerically stable log_softmax along dim=1 (max/sum -> XLU; exp/log -> EUP).
    m = jnp.max(logits, axis=1, keepdims=True)
    shifted = logits - m
    lse = jnp.log(jnp.sum(jnp.exp(shifted), axis=1, keepdims=True))
    out_ref[...] = shifted - lse


def prepare_trigram_params(emb_table, w1, b1, w2, b2, context_size,
                           matmul_dtype=jnp.float32):
    """One-time parameter prep (call once, reuse across forward calls).

    Pre-fuses the embedding table with linear1 per context slot
        F[c] = emb @ W1[c*E:(c+1)*E, :]   (V, H)
    and zero-pads everything to lane-dense shapes.  `matmul_dtype` controls the MXU
    operand dtype (bf16 recommended on v6e/v7x); biases / elementwise math stay f32.
    Weights follow the x @ W + b convention (W1: (C*E, H), W2: (H, V))."""
    V, E = emb_table.shape
    CE, H = w1.shape
    assert CE == context_size * E, (CE, context_size, E)
    Vp = _round_up(V, LANE)
    Hp = _round_up(H, LANE)

    w1_r = w1.astype(jnp.float32).reshape(context_size, E, H)                 # (C, E, H)
    fused = jnp.einsum("ve,ceh->cvh", emb_table.astype(jnp.float32), w1_r)    # (C, V, H)

    f_p = jnp.zeros((context_size, Vp, Hp), matmul_dtype)
    f_p = f_p.at[:, :V, :H].set(fused.astype(matmul_dtype))
    b1_p = jnp.zeros((1, Hp), jnp.float32).at[:, :H].set(
        b1.reshape(1, H).astype(jnp.float32))
    w2_p = jnp.zeros((Hp, Vp), matmul_dtype).at[:H, :V].set(w2.astype(matmul_dtype))
    b2_p = jnp.zeros((1, Vp), jnp.float32).at[:, :V].set(
        b2.reshape(1, V).astype(jnp.float32))
    return f_p, b1_p, w2_p, b2_p


@functools.partial(jax.jit, static_argnames=("vocab_size",))
def trigram_forward(inputs, f_p, b1_p, w2_p, b2_p, *, vocab_size):
    """TrigramModel.forward with pre-fused params.  inputs: (B, C) int.
    Returns (B, V) f32 log-probs."""
    B, C = inputs.shape
    Cf, Vp, Hp = f_p.shape
    assert Cf == C

    # Batch tile: multiple of 8 sublanes, fat enough to amortize per-step overhead,
    # capped so the double-buffered (TB, Vp) f32 output blocks stay within a few MiB.
    tb_cap = max(SUBLANE, min(1024, _round_down((8 << 20) // (Vp * 4 * 2), SUBLANE)))
    TB = min(_round_up(B, SUBLANE), tb_cap)
    Bp = _round_up(B, TB)

    idx_p = jnp.zeros((Bp, C), jnp.int32).at[:B, :].set(inputs.astype(jnp.int32))

    itemsize = jnp.dtype(f_p.dtype).itemsize
    resident = 2 * (TB * C * 4 + f_p.size * itemsize + b1_p.size * 4
                    + w2_p.size * itemsize + b2_p.size * 4 + TB * Vp * 4)
    scratch = 4 * TB * Vp * 4 + 2 * TB * Hp * 4          # one-hot / logits / acc temps
    vmem_limit = int(max(16 << 20, min(100 << 20, resident + scratch + (2 << 20))))

    kernel = functools.partial(trigram_kernel, vocab_size=vocab_size, context_size=C)

    out = pl.pallas_call(
        kernel,
        out_shape=jax.ShapeDtypeStruct((Bp, Vp), jnp.float32),
        grid=(Bp // TB,),
        in_specs=[
            pl.BlockSpec((TB, C), lambda i: (i, 0)),          # token ids (batch-tiled)
            pl.BlockSpec((C, Vp, Hp), lambda i: (0, 0, 0)),   # fused emb@W1 tables (resident)
            pl.BlockSpec((1, Hp), lambda i: (0, 0)),          # b1 (resident)
            pl.BlockSpec((Hp, Vp), lambda i: (0, 0)),         # W2 (resident)
            pl.BlockSpec((1, Vp), lambda i: (0, 0)),          # b2 (resident)
        ],
        out_specs=pl.BlockSpec((TB, Vp), lambda i: (i, 0)),   # lane-dense stores
        compiler_params=pltpu.CompilerParams(
            dimension_semantics=("parallel",),
            vmem_limit_bytes=vmem_limit),
    )(idx_p, f_p, b1_p, w2_p, b2_p)

    return out[:B, :vocab_size]


def reference_forward(inputs, emb_table, w1, b1, w2, b2):
    B, C = inputs.shape
    E = emb_table.shape[1]
    embeds = emb_table[inputs].reshape(B, C * E)
    h = jnp.tanh(embeds @ w1 + b1)
    logits = h @ w2 + b2
    return jax.nn.log_softmax(logits, axis=1)


if __name__ == "__main__":
    # Small shapes consistent with a trigram language model.
    vocab_size = 32
    embedding_dim = 16
    context_size = 2      # trigram: predict next token from the 2 previous tokens
    h = 32
    batch = 8

    key = jax.random.PRNGKey(0)
    k_emb, k_w1, k_b1, k_w2, k_b2, k_in = jax.random.split(key, 6)

    emb_table = jax.random.normal(k_emb, (vocab_size, embedding_dim), jnp.float32)
    w1 = jax.random.normal(k_w1, (context_size * embedding_dim, h), jnp.float32) * 0.1
    b1 = jax.random.normal(k_b1, (1, h), jnp.float32) * 0.1
    w2 = jax.random.normal(k_w2, (h, vocab_size), jnp.float32) * 0.1
    b2 = jax.random.normal(k_b2, (1, vocab_size), jnp.float32) * 0.1

    inputs = jax.random.randint(k_in, (batch, context_size), 0, vocab_size, jnp.int32)

    ref = reference_forward(inputs, emb_table, w1, b1, w2, b2)

    # f32 MXU operands (matches the PyTorch forward to f32 rounding).
    params_f32 = prepare_trigram_params(emb_table, w1, b1, w2, b2, context_size,
                                        matmul_dtype=jnp.float32)
    out_f32 = jax.block_until_ready(
        trigram_forward(inputs, *params_f32, vocab_size=vocab_size))
    assert out_f32.shape == (batch, vocab_size)
    assert jnp.allclose(out_f32, ref, atol=1e-4, rtol=1e-4), (
        float(jnp.max(jnp.abs(out_f32 - ref))))

    # bf16 MXU operands (v6e / v7x fast path); f32 accumulation and elementwise math.
    params_bf16 = prepare_trigram_params(emb_table, w1, b1, w2, b2, context_size,
                                         matmul_dtype=jnp.bfloat16)
    out_bf16 = jax.block_until_ready(
        trigram_forward(inputs, *params_bf16, vocab_size=vocab_size))
    assert out_bf16.shape == (batch, vocab_size)
    assert jnp.allclose(out_bf16, ref, atol=1e-1), (
        float(jnp.max(jnp.abs(out_bf16 - ref))))

    print("KERNEL_OK")
</pallas_src>

<mosaic_0001>
module attributes {stable_mosaic.version = 11 : i64} {
  func.func @trigram_kernel(%arg0: i32, %arg1: memref<8x2xi32, #tpu.memory_space<vmem>>, %arg2: memref<2x128x128xf32, #tpu.memory_space<vmem>>, %arg3: memref<1x128xf32, #tpu.memory_space<vmem>>, %arg4: memref<128x128xf32, #tpu.memory_space<vmem>>, %arg5: memref<1x128xf32, #tpu.memory_space<vmem>>, %arg6: memref<8x128xf32, #tpu.memory_space<vmem>>) attributes {dimension_semantics = [#tpu.dimension_semantics<parallel>], iteration_bounds = array<i64: 1>, scalar_prefetch = 0 : i64, scratch_operands = 0 : i64, tpu.core_type = #tpu.core_type<tc>, window_params = [{transform_indices = @transform_0, window_bounds = array<i64: 8, 2>}, {pipeline_mode = #tpu.pipeline_mode<synchronous>, transform_indices = @transform_1, window_bounds = array<i64: 2, 128, 128>}, {pipeline_mode = #tpu.pipeline_mode<synchronous>, transform_indices = @transform_2, window_bounds = array<i64: 1, 128>}, {pipeline_mode = #tpu.pipeline_mode<synchronous>, transform_indices = @transform_3, window_bounds = array<i64: 128, 128>}, {pipeline_mode = #tpu.pipeline_mode<synchronous>, transform_indices = @transform_4, window_bounds = array<i64: 1, 128>}, {transform_indices = @transform_5, window_bounds = array<i64: 8, 128>}]} {
    %c0 = arith.constant 0 : index
    %c0_0 = arith.constant 0 : index
    %0 = vector.load %arg1[%c0, %c0_0] : memref<8x2xi32, #tpu.memory_space<vmem>>, vector<8x2xi32>
    %1 = tpu.iota {dimensions = array<i32: 1>} : vector<8x128xi32>
    %cst = arith.constant 0.000000e+00 : f32
    %2 = vector.broadcast %cst : f32 to vector<8x128xf32>
    %3 = vector.extract_strided_slice %0 {offsets = [0, 0], sizes = [8, 1], strides = [1, 1]} : vector<8x2xi32> to vector<8x1xi32>
    %4 = vector.broadcast %3 : vector<8x1xi32> to vector<8x128xi32>
    %5 = arith.cmpi eq, %4, %1 : vector<8x128xi32>
    %6 = arith.extui %5 : vector<8x128xi1> to vector<8x128xi32>
    %7 = arith.sitofp %6 : vector<8x128xi32> to vector<8x128xf32>
    %c0_1 = arith.constant 0 : index
    %c0_2 = arith.constant 0 : index
    %c0_3 = arith.constant 0 : index
    %8 = vector.load %arg2[%c0_1, %c0_2, %c0_3] : memref<2x128x128xf32, #tpu.memory_space<vmem>>, vector<1x128x128xf32>
    %9 = vector.shape_cast %8 : vector<1x128x128xf32> to vector<128x128xf32>
    %cst_4 = arith.constant dense<0.000000e+00> : vector<8x128xf32>
    %10 = tpu.matmul %7, %9, %cst_4 {dimension_numbers = #tpu.dot_dimension_numbers<[1], [0], [0], [1], [0, 0, 1, 1], [], []>} : vector<8x128xf32>, vector<128x128xf32>, vector<8x128xf32> -> vector<8x128xf32>
    %11 = arith.addf %2, %10 : vector<8x128xf32>
    %12 = vector.extract_strided_slice %0 {offsets = [0, 1], sizes = [8, 1], strides = [1, 1]} : vector<8x2xi32> to vector<8x1xi32>
    %13 = vector.broadcast %12 : vector<8x1xi32> to vector<8x128xi32>
    %14 = arith.cmpi eq, %13, %1 : vector<8x128xi32>
    %15 = arith.extui %14 : vector<8x128xi1> to vector<8x128xi32>
    %16 = arith.sitofp %15 : vector<8x128xi32> to vector<8x128xf32>
    %c1 = arith.constant 1 : index
    %c0_5 = arith.constant 0 : index
    %c0_6 = arith.constant 0 : index
    %17 = vector.load %arg2[%c1, %c0_5, %c0_6] : memref<2x128x128xf32, #tpu.memory_space<vmem>>, vector<1x128x128xf32>
    %18 = vector.shape_cast %17 : vector<1x128x128xf32> to vector<128x128xf32>
    %cst_7 = arith.constant dense<0.000000e+00> : vector<8x128xf32>
    %19 = tpu.matmul %16, %18, %cst_7 {dimension_numbers = #tpu.dot_dimension_numbers<[1], [0], [0], [1], [0, 0, 1, 1], [], []>} : vector<8x128xf32>, vector<128x128xf32>, vector<8x128xf32> -> vector<8x128xf32>
    %20 = arith.addf %11, %19 : vector<8x128xf32>
    %c0_8 = arith.constant 0 : index
    %c0_9 = arith.constant 0 : index
    %21 = vector.load %arg3[%c0_8, %c0_9] : memref<1x128xf32, #tpu.memory_space<vmem>>, vector<1x128xf32>
    %22 = vector.broadcast %21 : vector<1x128xf32> to vector<8x128xf32>
    %23 = arith.addf %20, %22 : vector<8x128xf32>
    %24 = math.tanh %23 : vector<8x128xf32>
    %c0_10 = arith.constant 0 : index
    %c0_11 = arith.constant 0 : index
    %25 = vector.load %arg4[%c0_10, %c0_11] : memref<128x128xf32, #tpu.memory_space<vmem>>, vector<128x128xf32>
    %cst_12 = arith.constant dense<0.000000e+00> : vector<8x128xf32>
    %26 = tpu.matmul %24, %25, %cst_12 {dimension_numbers = #tpu.dot_dimension_numbers<[1], [0], [0], [1], [0, 0, 1, 1], [], []>} : vector<8x128xf32>, vector<128x128xf32>, vector<8x128xf32> -> vector<8x128xf32>
    %c0_13 = arith.constant 0 : index
    %c0_14 = arith.constant 0 : index
    %27 = vector.load %arg5[%c0_13, %c0_14] : memref<1x128xf32, #tpu.memory_space<vmem>>, vector<1x128xf32>
    %28 = vector.broadcast %27 : vector<1x128xf32> to vector<8x128xf32>
    %29 = arith.addf %26, %28 : vector<8x128xf32>
    %30 = tpu.iota {dimensions = array<i32: 1>} : vector<8x128xi32>
    %c32_i32 = arith.constant 32 : i32
    %31 = vector.broadcast %c32_i32 : i32 to vector<8x128xi32>
    %32 = arith.cmpi slt, %30, %31 : vector<8x128xi32>
    %cst_15 = arith.constant -1.000000e+30 : f32
    %33 = vector.broadcast %cst_15 : f32 to vector<8x128xf32>
    %34 = arith.select %32, %29, %33 : vector<8x128xi1>, vector<8x128xf32>
    %cst_16 = arith.constant dense<0xFF800000> : vector<8xf32>
    %35 = vector.multi_reduction <maximumf>, %34, %cst_16 [1] : vector<8x128xf32> to vector<8xf32>
    %36 = vector.shape_cast %35 : vector<8xf32> to vector<8x1xf32>
    %37 = vector.broadcast %36 : vector<8x1xf32> to vector<8x128xf32>
    %38 = arith.subf %34, %37 : vector<8x128xf32>
    %39 = math.exp %38 : vector<8x128xf32>
    %cst_17 = arith.constant dense<0.000000e+00> : vector<8xf32>
    %40 = vector.multi_reduction <add>, %39, %cst_17 [1] : vector<8x128xf32> to vector<8xf32>
    %41 = vector.shape_cast %40 : vector<8xf32> to vector<8x1xf32>
    %42 = math.log %41 : vector<8x1xf32>
    %43 = vector.broadcast %42 : vector<8x1xf32> to vector<8x128xf32>
    %44 = arith.subf %38, %43 : vector<8x128xf32>
    %c0_18 = arith.constant 0 : index
    %c0_19 = arith.constant 0 : index
    %45 = vector.load %arg6[%c0_18, %c0_19] : memref<8x128xf32, #tpu.memory_space<vmem>>, vector<8x128xf32>
    tpu.vector_store %arg6[%c0_18, %c0_19], %44 {strides = array<i32>} : memref<8x128xf32, #tpu.memory_space<vmem>>, vector<8x128xf32>,
    return
  }
  func.func @transform_0(%arg0: i32) -> (i32, i32) {
    %c0_i32 = arith.constant 0 : i32
    %c0_i32_0 = arith.constant 0 : i32
    return %arg0, %c0_i32 : i32, i32
  }
  func.func @transform_1(%arg0: i32) -> (i32, i32, i32) {
    %c0_i32 = arith.constant 0 : i32
    %c0_i32_0 = arith.constant 0 : i32
    %c0_i32_1 = arith.constant 0 : i32
    %c0_i32_2 = arith.constant 0 : i32
    return %c0_i32, %c0_i32_0, %c0_i32_1 : i32, i32, i32
  }
  func.func @transform_2(%arg0: i32) -> (i32, i32) {
    %c0_i32 = arith.constant 0 : i32
    %c0_i32_0 = arith.constant 0 : i32
    %c0_i32_1 = arith.constant 0 : i32
    return %c0_i32, %c0_i32_0 : i32, i32
  }
  func.func @transform_3(%arg0: i32) -> (i32, i32) {
    %c0_i32 = arith.constant 0 : i32
    %c0_i32_0 = arith.constant 0 : i32
    %c0_i32_1 = arith.constant 0 : i32
    return %c0_i32, %c0_i32_0 : i32, i32
  }
  func.func @transform_4(%arg0: i32) -> (i32, i32) {
    %c0_i32 = arith.constant 0 : i32
    %c0_i32_0 = arith.constant 0 : i32
    %c0_i32_1 = arith.constant 0 : i32
    return %c0_i32, %c0_i32_0 : i32, i32
  }
  func.func @transform_5(%arg0: i32) -> (i32, i32) {
    %c0_i32 = arith.constant 0 : i32
    %c0_i32_0 = arith.constant 0 : i32
    return %arg0, %c0_i32 : i32, i32
  }
}

</mosaic_0001>

<llo_original>
// kernel: trigram_forward.1
$region0: #{trigram_forward.1}
  #allocation0 [shape = 'u32[]', space=smem, size = 0x4, offset = 0x4, fixed_abs, tag = 'smem constant byte address 0x4 - core index']
  #allocation1 [shape = 'u32[72,128]{1,0:T(1,128)}', space=vmem, size = 0x9000, scoped, tag = 'internal scratch']
  %s0 = inlined_call_operand.vmem [shape: s32[8,2], index: 0, kind: input, shape index: {}]
  %s1 = inlined_call_operand.hbm [shape: f32[2,128,128], index: 1, kind: input, shape index: {}]
  %s2 = inlined_call_operand.vmem [shape: f32[1,128], index: 2, kind: input, shape index: {}]
  %s3 = inlined_call_operand.hbm [shape: f32[128,128], index: 3, kind: input, shape index: {}]
  %s4 = inlined_call_operand.vmem [shape: f32[1,128], index: 4, kind: input, shape index: {}]
  %s5 = inlined_call_operand.hbm [shape: f32[8,128], index: 5, kind: output, shape index: {}]
  %s6 = sld [smem:[#allocation0]]
  $region38: #{trigram_forward.1} parent=0
    _
  %s8 = ssub.s32 1, %s6
  %s9 = scalar_select 0, %s8, %s6
  $region1: #{trigram_forward.1} parent=0
    #allocation2 [shape = 'u8[131072]{0}', space=vmem, size = 0x20000, scoped, tag = 'input window, operand 1, single buffered']
    #allocation3 [shape = 's32[1]{0}', space=sflag, size = 0x4, scoped, tag = 'scoped memory for trigram_forward.1']
    #allocation4 [shape = 's32[1]{0}', space=sflag, size = 0x4, scoped, tag = 'scoped memory for trigram_forward.1']
    #allocation5 [shape = 'u8[65536]{0}', space=vmem, size = 0x10000, scoped, tag = 'input window, operand 3, single buffered']
    #allocation6 [shape = 's32[1]{0}', space=sflag, size = 0x4, scoped, tag = 'scoped memory for trigram_forward.1']
    #allocation7 [shape = 'u8[4096]{0}', space=vmem, size = 0x1000, scoped, tag = 'output window, operand 0, single buffered']
    %10 = vsyncpa [#allocation3], 0
    %11 = vsyncpa [#allocation6], 0
    %12 = vsyncpa [#allocation4], 0
    // Predicated region
    $region2: #{trigram_forward.1} parent=1 // pred_check
      _
    $region3: #{trigram_forward.1} parent=1 // pred_check_branch
      %14 = sbr.rel (0) target = $region5
    $region4: #{trigram_forward.1} parent=1 // pred_region
      _
    $region5: #{trigram_forward.1} parent=1 // pred_fallthru
      _
    // Predicated region
    $region6: #{trigram_forward.1} parent=1 // pred_check
      _
    $region7: #{trigram_forward.1} parent=1 // pred_check_branch
      %16 = sbr.rel (0) target = $region9
    $region8: #{trigram_forward.1} parent=1 // pred_region
      %18 = vsyncadd [#allocation3], 0
      %s19 = sshll.u32 %s1, 4
      %s20 = int_to_ptr.hbm [resolvable:$true] %s19
      %s21 = sshll.u32 [#allocation2], 4
      %s22 = int_to_ptr.vmem [resolvable:$true] %s21
      %27 = dma.hbm_to_vmem [thread:$0]  %s20, 4096, %s22, [#allocation3], 128, 128, 8
    $region9: #{trigram_forward.1} parent=1 // pred_fallthru
      _
    // Predicated region
    $region10: #{trigram_forward.1} parent=1 // pred_check
      _
    $region11: #{trigram_forward.1} parent=1 // pred_check_branch
      %29 = sbr.rel (0) target = $region13
    $region12: #{trigram_forward.1} parent=1 // pred_region
      _
    $region13: #{trigram_forward.1} parent=1 // pred_fallthru
      _
    // Predicated region
    $region14: #{trigram_forward.1} parent=1 // pred_check
      _
    $region15: #{trigram_forward.1} parent=1 // pred_check_branch
      %31 = sbr.rel (0) target = $region17
    $region16: #{trigram_forward.1} parent=1 // pred_region
      %33 = vsyncadd [#allocation6], 0
      %s34 = sshll.u32 %s3, 4
      %s35 = int_to_ptr.hbm [resolvable:$true] %s34
      %s36 = sshll.u32 [#allocation5], 4
      %s37 = int_to_ptr.vmem [resolvable:$true] %s36
      %42 = dma.hbm_to_vmem [thread:$0]  %s35, 2048, %s37, [#allocation6], 128, 128, 8
    $region17: #{trigram_forward.1} parent=1 // pred_fallthru
      _
    // Predicated region
    $region18: #{trigram_forward.1} parent=1 // pred_check
      _
    $region19: #{trigram_forward.1} parent=1 // pred_check_branch
      %44 = sbr.rel (0) target = $region21
    $region20: #{trigram_forward.1} parent=1 // pred_region
      _
    $region21: #{trigram_forward.1} parent=1 // pred_fallthru
      _
    // Predicated region
    $region22: #{trigram_forward.1} parent=1 // pred_check
      _
    $region23: #{trigram_forward.1} parent=1 // pred_check_branch
      %46 = sbr.rel (0) target = $region25
    $region24: #{trigram_forward.1} parent=1 // pred_region
      %48 = dma.done [#allocation3], 4096
    $region25: #{trigram_forward.1} parent=1 // pred_fallthru
      _
    // Predicated region
    $region26: #{trigram_forward.1} parent=1 // pred_check
      _
    $region27: #{trigram_forward.1} parent=1 // pred_check_branch
      %50 = sbr.rel (0) target = $region29
    $region28: #{trigram_forward.1} parent=1 // pred_region
      %52 = dma.done [#allocation6], 2048
    $region29: #{trigram_forward.1} parent=1 // pred_fallthru
      _
    %v53 = vld [vmem:[%s0] sm:$0xff]
    %v54 = vlaneseq
    %v55 = vand.u32 %v54, 127
    %56 = vset.pattern.permute.xlu0 0
    %57 = vperm.xlu0 %56, %v53
    %v58 = vpop.permute.xlu0 %57
    %vm59 = vcmp.eq.s32.totalorder %v58, %v55
    %v60 = vsel %vm59, 1, 0
    %v61 = vcvt.s32.f32 %v60
    %v62 = vld [vmem:[#allocation2] sm:$0xff]
    %v63 = vld [vmem:[#allocation2 + $0x8] sm:$0xff]
    %v64 = vld [vmem:[#allocation2 + $0x10] sm:$0xff]
    %v65 = vld [vmem:[#allocation2 + $0x18] sm:$0xff]
    %v66 = vld [vmem:[#allocation2 + $0x20] sm:$0xff]
    %v67 = vld [vmem:[#allocation2 + $0x28] sm:$0xff]
    %v68 = vld [vmem:[#allocation2 + $0x30] sm:$0xff]
    %v69 = vld [vmem:[#allocation2 + $0x38] sm:$0xff]
    %v70 = vld [vmem:[#allocation2 + $0x40] sm:$0xff]
    %v71 = vld [vmem:[#allocation2 + $0x48] sm:$0xff]
    %v72 = vld [vmem:[#allocation2 + $0x50] sm:$0xff]
    %v73 = vld [vmem:[#allocation2 + $0x58] sm:$0xff]
    %v74 = vld [vmem:[#allocation2 + $0x60] sm:$0xff]
    %v75 = vld [vmem:[#allocation2 + $0x68] sm:$0xff]
    %v76 = vld [vmem:[#allocation2 + $0x70] sm:$0xff]
    %v77 = vld [vmem:[#allocation2 + $0x78] sm:$0xff]
    %78 = vset.pattern.permute.xlu0 1
    %79 = vperm.xlu0 %78, %v53
    %v80 = vpop.permute.xlu0 %79
    %vm81 = vcmp.eq.s32.totalorder %v80, %v55
    %v82 = vsel %vm81, 1, 0
    %v83 = vcvt.s32.f32 %v82
    %s84 = scalar_lea.vmem [#allocation2], 128
    %v85 = vld [vmem:[%s84] sm:$0xff]
    %v86 = vld [vmem:[%s84 + $0x8] sm:$0xff]
    %v87 = vld [vmem:[%s84 + $0x10] sm:$0xff]
    %v88 = vld [vmem:[%s84 + $0x18] sm:$0xff]
    %v89 = vld [vmem:[%s84 + $0x20] sm:$0xff]
    %v90 = vld [vmem:[%s84 + $0x28] sm:$0xff]
    %v91 = vld [vmem:[%s84 + $0x30] sm:$0xff]
    %v92 = vld [vmem:[%s84 + $0x38] sm:$0xff]
    %v93 = vld [vmem:[%s84 + $0x40] sm:$0xff]
    %v94 = vld [vmem:[%s84 + $0x48] sm:$0xff]
    %v95 = vld [vmem:[%s84 + $0x50] sm:$0xff]
    %v96 = vld [vmem:[%s84 + $0x58] sm:$0xff]
    %v97 = vld [vmem:[%s84 + $0x60] sm:$0xff]
    %v98 = vld [vmem:[%s84 + $0x68] sm:$0xff]
    %v99 = vld [vmem:[%s84 + $0x70] sm:$0xff]
    %v100 = vld [vmem:[%s84 + $0x78] sm:$0xff]
    %101 = vmatpush.msra.mxu0 %v100
    %102 = vmatpush.msra.mxu0 %v99
    %103 = vmatpush.msra.mxu0 %v98
    %104 = vmatpush.msra.mxu0 %v97
    %105 = vmatpush.msra.mxu0 %v96
    %106 = vmatpush.msra.mxu0 %v95
    %107 = vmatpush.msra.mxu0 %v94
    %108 = vmatpush.msra.mxu0 %v93
    %109 = vmatpush.msra.mxu0 %v92
    %110 = vmatpush.msra.mxu0 %v91
    %111 = vmatpush.msra.mxu0 %v90
    %112 = vmatpush.msra.mxu0 %v89
    %113 = vmatpush.msra.mxu0 %v88
    %114 = vmatpush.msra.mxu0 %v87
    %115 = vmatpush.msra.mxu0 %v86
    %116 = vmatpush.msra.mxu0 %v85
    %117 = vmatmul.f32.gmra.mxu0 %v83
    %v118 = vpop.f32.mrf.mxu0
    %v119 = vadd.f32 0.0, %v118
    %120 = vdwg.mxu0
    %121 = vmatpush.msra.mxu0 %v77
    %122 = vmatpush.msra.mxu0 %v76
    %123 = vmatpush.msra.mxu0 %v75
    %124 = vmatpush.msra.mxu0 %v74
    %125 = vmatpush.msra.mxu0 %v73
    %126 = vmatpush.msra.mxu0 %v72
    %127 = vmatpush.msra.mxu0 %v71
    %128 = vmatpush.msra.mxu0 %v70
    %129 = vmatpush.msra.mxu0 %v69
    %130 = vmatpush.msra.mxu0 %v68
    %131 = vmatpush.msra.mxu0 %v67
    %132 = vmatpush.msra.mxu0 %v66
    %133 = vmatpush.msra.mxu0 %v65
    %134 = vmatpush.msra.mxu0 %v64
    %135 = vmatpush.msra.mxu0 %v63
    %136 = vmatpush.msra.mxu0 %v62
    %137 = vmatmul.f32.gmra.mxu0 %v61
    %v138 = vpop.f32.mrf.mxu0
    %v139 = vadd.f32 %v119, %v138
    %140 = vdwg.mxu0
    %v141 = vld [vmem:[%s2] sm:$0x1]
    %v143 = vperm.slane %v141, 0
    %v145 = vadd.f32 %v139, %v143
    %v146 = vtanh.pop %v145
    %v147 = vld [vmem:[#allocation5] sm:$0xff]
    %v148 = vld [vmem:[#allocation5 + $0x8] sm:$0xff]
    %v149 = vld [vmem:[#allocation5 + $0x10] sm:$0xff]
    %v150 = vld [vmem:[#allocation5 + $0x18] sm:$0xff]
    %v151 = vld [vmem:[#allocation5 + $0x20] sm:$0xff]
    %v152 = vld [vmem:[#allocation5 + $0x28] sm:$0xff]
    %v153 = vld [vmem:[#allocation5 + $0x30] sm:$0xff]
    %v154 = vld [vmem:[#allocation5 + $0x38] sm:$0xff]
    %v155 = vld [vmem:[#allocation5 + $0x40] sm:$0xff]
    %v156 = vld [vmem:[#allocation5 + $0x48] sm:$0xff]
    %v157 = vld [vmem:[#allocation5 + $0x50] sm:$0xff]
    %v158 = vld [vmem:[#allocation5 + $0x58] sm:$0xff]
    %v159 = vld [vmem:[#allocation5 + $0x60] sm:$0xff]
    %v160 = vld [vmem:[#allocation5 + $0x68] sm:$0xff]
    %v161 = vld [vmem:[#allocation5 + $0x70] sm:$0xff]
    %v162 = vld [vmem:[#allocation5 + $0x78] sm:$0xff]
    %v163 = vld [vmem:[%s4] sm:$0x1]
    %v165 = vperm.slane %v163, 0
    %167 = vmatpush.msra.mxu0 %v162
    %168 = vmatpush.msra.mxu0 %v161
    %169 = vmatpush.msra.mxu0 %v160
    %170 = vmatpush.msra.mxu0 %v159
    %171 = vmatpush.msra.mxu0 %v158
    %172 = vmatpush.msra.mxu0 %v157
    %173 = vmatpush.msra.mxu0 %v156
    %174 = vmatpush.msra.mxu0 %v155
    %175 = vmatpush.msra.mxu0 %v154
    %176 = vmatpush.msra.mxu0 %v153
    %177 = vmatpush.msra.mxu0 %v152
    %178 = vmatpush.msra.mxu0 %v151
    %179 = vmatpush.msra.mxu0 %v150
    %180 = vmatpush.msra.mxu0 %v149
    %181 = vmatpush.msra.mxu0 %v148
    %182 = vmatpush.msra.mxu0 %v147
    %183 = vmatmul.f32.gmra.mxu0 %v146
    %v184 = vpop.f32.mrf.mxu0
    %v185 = vadd.f32 %v165, %v184
    %186 = vdwg.mxu0
    %vm187 = vcmp.lt.s32.totalorder %v55, 32
    %v188 = vsel %vm187, %v185, -1e+30
    %189 = vmax.xlane.f32.xlu0 %v188
    %v190 = vpop.xlane.xlu0 %189
    %v191 = vsub.f32 %v188, %v190
    %v192 = vmul.f32 %v191, 1.442695
    %v193 = vpow.pop %v192
    %194 = vadd.xlane.f32.xlu0 %v193
    %v195 = vpop.xlane.xlu0 %194
    %v196 = vlog2.pop %v195
    %v197 = vmul.f32 %v196, 0.6931472
    %v198 = vsub.f32 %v191, %v197
    %199 = vst [vmem:[#allocation7] sm:$0xff] %v198
    // Predicated region
    $region30: #{trigram_forward.1} parent=1 // pred_check
      _
    $region31: #{trigram_forward.1} parent=1 // pred_check_branch
      %201 = sbr.rel (0) target = $region33
    $region32: #{trigram_forward.1} parent=1 // pred_region
      %203 = vsyncadd [#allocation4], 0
      %s205 = sshll.u32 [#allocation7], 4
      %s206 = int_to_ptr.vmem [resolvable:$true] %s205
      %s207 = sshll.u32 %s5, 4
      %s208 = int_to_ptr.hbm [resolvable:$true] %s207
      %210 = dma.vmem_to_hbm [thread:$0]  %s206, 128, %s208, [#allocation4]
    $region33: #{trigram_forward.1} parent=1 // pred_fallthru
      _
    // Predicated region
    $region34: #{trigram_forward.1} parent=1 // pred_check
      _
    $region35: #{trigram_forward.1} parent=1 // pred_check_branch
      %212 = sbr.rel (0) target = $region37
    $region36: #{trigram_forward.1} parent=1 // pred_region
      %214 = dma.done [#allocation4], 128
    $region37: #{trigram_forward.1} parent=1 // pred_fallthru
      _
    %215 = vsyncpa [#allocation3], 1
    %216 = vsyncpa [#allocation6], 1
    %217 = vsyncpa [#allocation4], 1

</llo_original>
